<compile_context>
chip_gen: v7x
topology: tpu7x:2x2x1
jax: 0.10.0
libtpu: 0.0.40
codegen_flags: <defaults>
</compile_context>

<pallas_src>
import functools

import jax
import jax.numpy as jnp
from jax import lax
from jax.experimental import pallas as pl
from jax.experimental.pallas import tpu as pltpu


def gcn_kernel(a_ref, x_ref, w1_ref, b1_ref, w2_ref, b2_ref, out_ref,
               *, batch, n_pad, n_real):
    a = a_ref[...]                                     # [BN, BN]   bf16 (block-diag)
    x = x_ref[...]                                     # [BN, F_in] bf16

    # ---- GraphConv 1: aggregate then project ((A X) W1; F_in <= H) ----
    ax = jnp.dot(a, x, preferred_element_type=jnp.float32)             # [BN, F_in] f32
    h = jnp.dot(ax.astype(jnp.bfloat16), w1_ref[...],
                preferred_element_type=jnp.float32)                     # [BN, Hp]   f32
    h = jnp.maximum(h + b1_ref[...], 0.0)                               # bias + ReLU

    # ---- GraphConv 2 ----
    ah = jnp.dot(a, h.astype(jnp.bfloat16),
                 preferred_element_type=jnp.float32)                    # [BN, Hp]   f32
    h2 = jnp.dot(ah.astype(jnp.bfloat16), w2_ref[...],
                 preferred_element_type=jnp.float32)                    # [BN, Hp]   f32
    h2 = jnp.maximum(h2 + b2_ref[...], 0.0)

    # ---- Global max pooling per graph ----
    if n_real != n_pad:
        # Mask padded node rows so relu(bias) on fake nodes can't win the max.
        bn, hp = h2.shape
        row = lax.broadcasted_iota(jnp.int32, (bn, hp), 0)
        h2 = jnp.where((row % n_pad) < n_real, h2, -jnp.inf)

    hp = h2.shape[-1]
    out_ref[...] = jnp.max(h2.reshape(batch, n_pad, hp), axis=1)        # [B, Hp]


def gcn_forward(a_norm_b, x_b, w1, b1, w2, b2):
    """Batched GCN forward.

    a_norm_b: [B, N, N] normalized adjacency (per graph)
    x_b:      [B, N, F_in] node features
    w1: [F_in, H], b1: [1, H], w2: [H, H], b2: [1, H]
    returns:  [B, H] pooled graph embeddings (f32)
    """
    B, N, _ = a_norm_b.shape
    f_in, h_feats = w1.shape
    n_pad = 8 * pl.cdiv(N, 8)                      # sublane-clean per-graph rows
    h_pad = 128 * pl.cdiv(h_feats, 128)            # lane-dense hidden/output width
    bn = B * n_pad
    bf = jnp.bfloat16

    # Block-diagonal normalized adjacency over the whole batch (zero-padded nodes
    # have zero rows/cols -> contribute nothing to aggregation).
    a_pad = jnp.pad(a_norm_b, ((0, 0), (0, n_pad - N), (0, n_pad - N)))
    a_big = jnp.einsum("bc,bij->bicj", jnp.eye(B, dtype=a_pad.dtype), a_pad)
    a_big = a_big.reshape(bn, bn).astype(bf)

    x_flat = jnp.pad(x_b, ((0, 0), (0, n_pad - N), (0, 0))).reshape(bn, f_in).astype(bf)

    # Zero-pad the hidden dim so every store is lane-dense (padded cols stay 0
    # through ReLU/max and are sliced off afterwards).
    w1_p = jnp.pad(w1, ((0, 0), (0, h_pad - h_feats))).astype(bf)
    w2_p = jnp.pad(w2, ((0, h_pad - h_feats), (0, h_pad - h_feats))).astype(bf)
    b1_p = jnp.pad(b1, ((0, 0), (0, h_pad - h_feats))).astype(jnp.float32)
    b2_p = jnp.pad(b2, ((0, 0), (0, h_pad - h_feats))).astype(jnp.float32)

    out = pl.pallas_call(
        functools.partial(gcn_kernel, batch=B, n_pad=n_pad, n_real=N),
        out_shape=jax.ShapeDtypeStruct((B, h_pad), jnp.float32),
        grid=(1,),
        in_specs=[
            pl.BlockSpec((bn, bn), lambda i: (0, 0)),
            pl.BlockSpec((bn, f_in), lambda i: (0, 0)),
            pl.BlockSpec((f_in, h_pad), lambda i: (0, 0)),
            pl.BlockSpec((1, h_pad), lambda i: (0, 0)),
            pl.BlockSpec((h_pad, h_pad), lambda i: (0, 0)),
            pl.BlockSpec((1, h_pad), lambda i: (0, 0)),
        ],
        out_specs=pl.BlockSpec((B, h_pad), lambda i: (0, 0)),
        compiler_params=pltpu.CompilerParams(
            dimension_semantics=("arbitrary",),
        ),
    )(a_big, x_flat, w1_p, b1_p, w2_p, b2_p)

    return out[:, :h_feats]


def build_normalized_adjacency(src, dst, num_nodes):
    """Dense D_in^{-1/2} A D_out^{-1/2}, with zero-degree norms set to 0
    (matches DGL norm='both' with allow_zero_in_degree=True)."""
    a = jnp.zeros((num_nodes, num_nodes), jnp.float32)
    a = a.at[dst, src].add(1.0)                        # A[dst, src] = #edges src->dst
    deg_in = a.sum(axis=1)                             # in-degree of dst (row sums)
    deg_out = a.sum(axis=0)                            # out-degree of src (col sums)
    inv_sqrt_in = jnp.where(deg_in > 0, deg_in ** -0.5, 0.0)
    inv_sqrt_out = jnp.where(deg_out > 0, deg_out ** -0.5, 0.0)
    return inv_sqrt_in[:, None] * a * inv_sqrt_out[None, :]


def _reference_forward(a_b, x_b, w1, b1, w2, b2):
    """Pure-JAX reference reproducing the kernel numerics
    (bf16 matmul operands, f32 accumulation, f32 elementwise)."""
    bf = jnp.bfloat16
    a = a_b.astype(bf)
    ax = jnp.einsum("bij,bjf->bif", a, x_b.astype(bf),
                    preferred_element_type=jnp.float32)
    h = jnp.einsum("bif,fh->bih", ax.astype(bf), w1.astype(bf),
                   preferred_element_type=jnp.float32)
    h = jnp.maximum(h + b1, 0.0)
    ah = jnp.einsum("bij,bjh->bih", a, h.astype(bf),
                    preferred_element_type=jnp.float32)
    h2 = jnp.einsum("bih,hk->bik", ah.astype(bf), w2.astype(bf),
                    preferred_element_type=jnp.float32)
    h2 = jnp.maximum(h2 + b2, 0.0)
    return jnp.max(h2, axis=1)                          # [B, H]


if __name__ == "__main__":
    key = jax.random.PRNGKey(0)
    k_x, k_e, k_w1, k_w2 = jax.random.split(key, 4)

    batch = 8            # graphs processed per pallas_call
    num_nodes = 16
    in_feats = 8
    h_feats = 32

    # Synthetic graphs: each is a ring plus a few random directed edges.
    ring_src = jnp.arange(num_nodes, dtype=jnp.int32)
    ring_dst = (ring_src + 1) % num_nodes
    rand_edges = jax.random.randint(k_e, (batch, 2, 8), 0, num_nodes, dtype=jnp.int32)
    src_b = jnp.concatenate(
        [jnp.broadcast_to(ring_src, (batch, num_nodes)), rand_edges[:, 0]], axis=1)
    dst_b = jnp.concatenate(
        [jnp.broadcast_to(ring_dst, (batch, num_nodes)), rand_edges[:, 1]], axis=1)
    a_norm_b = jax.vmap(build_normalized_adjacency, in_axes=(0, 0, None))(
        src_b, dst_b, num_nodes)                        # [B, N, N] f32

    # Node features and deterministic (Xavier-ish uniform) parameters.
    x_b = jax.random.normal(k_x, (batch, num_nodes, in_feats), jnp.float32)
    lim1 = (6.0 / (in_feats + h_feats)) ** 0.5
    lim2 = (6.0 / (h_feats + h_feats)) ** 0.5
    w1 = jax.random.uniform(k_w1, (in_feats, h_feats), jnp.float32, -lim1, lim1)
    w2 = jax.random.uniform(k_w2, (h_feats, h_feats), jnp.float32, -lim2, lim2)
    b1 = jnp.zeros((1, h_feats), jnp.float32)
    b2 = jnp.zeros((1, h_feats), jnp.float32)

    out = gcn_forward(a_norm_b, x_b, w1, b1, w2, b2)
    jax.block_until_ready(out)

    ref = _reference_forward(a_norm_b, x_b, w1, b1, w2, b2)
    assert out.shape == (batch, h_feats)
    assert jnp.allclose(out, ref, atol=1e-3, rtol=1e-3)

    print("KERNEL_OK")
</pallas_src>

<mosaic_0001>
module attributes {stable_mosaic.version = 11 : i64} {
  func.func @gcn_kernel(%arg0: i32, %arg1: memref<128x128xbf16, #tpu.memory_space<vmem>>, %arg2: memref<128x8xbf16, #tpu.memory_space<vmem>>, %arg3: memref<8x128xbf16, #tpu.memory_space<vmem>>, %arg4: memref<1x128xf32, #tpu.memory_space<vmem>>, %arg5: memref<128x128xbf16, #tpu.memory_space<vmem>>, %arg6: memref<1x128xf32, #tpu.memory_space<vmem>>, %arg7: memref<8x128xf32, #tpu.memory_space<vmem>>) attributes {dimension_semantics = [#tpu.dimension_semantics<arbitrary>], iteration_bounds = array<i64: 1>, scalar_prefetch = 0 : i64, scratch_operands = 0 : i64, tpu.core_type = #tpu.core_type<tc>, window_params = [{pipeline_mode = #tpu.pipeline_mode<synchronous>, transform_indices = @transform_0, window_bounds = array<i64: 128, 128>}, {pipeline_mode = #tpu.pipeline_mode<synchronous>, transform_indices = @transform_1, window_bounds = array<i64: 128, 8>}, {pipeline_mode = #tpu.pipeline_mode<synchronous>, transform_indices = @transform_2, window_bounds = array<i64: 8, 128>}, {pipeline_mode = #tpu.pipeline_mode<synchronous>, transform_indices = @transform_3, window_bounds = array<i64: 1, 128>}, {pipeline_mode = #tpu.pipeline_mode<synchronous>, transform_indices = @transform_4, window_bounds = array<i64: 128, 128>}, {pipeline_mode = #tpu.pipeline_mode<synchronous>, transform_indices = @transform_5, window_bounds = array<i64: 1, 128>}, {pipeline_mode = #tpu.pipeline_mode<synchronous>, transform_indices = @transform_6, window_bounds = array<i64: 8, 128>}]} {
    %c0 = arith.constant 0 : index
    %c0_0 = arith.constant 0 : index
    %0 = vector.load %arg1[%c0, %c0_0] : memref<128x128xbf16, #tpu.memory_space<vmem>>, vector<128x128xbf16>
    %c0_1 = arith.constant 0 : index
    %c0_2 = arith.constant 0 : index
    %1 = vector.load %arg2[%c0_1, %c0_2] : memref<128x8xbf16, #tpu.memory_space<vmem>>, vector<128x8xbf16>
    %cst = arith.constant dense<0.000000e+00> : vector<128x8xf32>
    %2 = tpu.matmul %0, %1, %cst {dimension_numbers = #tpu.dot_dimension_numbers<[1], [0], [0], [1], [0, 0, 1, 1], [], []>} : vector<128x128xbf16>, vector<128x8xbf16>, vector<128x8xf32> -> vector<128x8xf32>
    %3 = arith.truncf %2 : vector<128x8xf32> to vector<128x8xbf16>
    %c0_3 = arith.constant 0 : index
    %c0_4 = arith.constant 0 : index
    %4 = vector.load %arg3[%c0_3, %c0_4] : memref<8x128xbf16, #tpu.memory_space<vmem>>, vector<8x128xbf16>
    %cst_5 = arith.constant dense<0.000000e+00> : vector<128x128xf32>
    %5 = tpu.matmul %3, %4, %cst_5 {dimension_numbers = #tpu.dot_dimension_numbers<[1], [0], [0], [1], [0, 0, 1, 1], [], []>} : vector<128x8xbf16>, vector<8x128xbf16>, vector<128x128xf32> -> vector<128x128xf32>
    %c0_6 = arith.constant 0 : index
    %c0_7 = arith.constant 0 : index
    %6 = vector.load %arg4[%c0_6, %c0_7] : memref<1x128xf32, #tpu.memory_space<vmem>>, vector<1x128xf32>
    %7 = vector.broadcast %6 : vector<1x128xf32> to vector<128x128xf32>
    %8 = arith.addf %5, %7 : vector<128x128xf32>
    %cst_8 = arith.constant 0.000000e+00 : f32
    %9 = vector.broadcast %cst_8 : f32 to vector<128x128xf32>
    %10 = arith.maximumf %8, %9 : vector<128x128xf32>
    %11 = arith.truncf %10 : vector<128x128xf32> to vector<128x128xbf16>
    %cst_9 = arith.constant dense<0.000000e+00> : vector<128x128xf32>
    %12 = tpu.matmul %0, %11, %cst_9 {dimension_numbers = #tpu.dot_dimension_numbers<[1], [0], [0], [1], [0, 0, 1, 1], [], []>} : vector<128x128xbf16>, vector<128x128xbf16>, vector<128x128xf32> -> vector<128x128xf32>
    %13 = arith.truncf %12 : vector<128x128xf32> to vector<128x128xbf16>
    %c0_10 = arith.constant 0 : index
    %c0_11 = arith.constant 0 : index
    %14 = vector.load %arg5[%c0_10, %c0_11] : memref<128x128xbf16, #tpu.memory_space<vmem>>, vector<128x128xbf16>
    %cst_12 = arith.constant dense<0.000000e+00> : vector<128x128xf32>
    %15 = tpu.matmul %13, %14, %cst_12 {dimension_numbers = #tpu.dot_dimension_numbers<[1], [0], [0], [1], [0, 0, 1, 1], [], []>} : vector<128x128xbf16>, vector<128x128xbf16>, vector<128x128xf32> -> vector<128x128xf32>
    %c0_13 = arith.constant 0 : index
    %c0_14 = arith.constant 0 : index
    %16 = vector.load %arg6[%c0_13, %c0_14] : memref<1x128xf32, #tpu.memory_space<vmem>>, vector<1x128xf32>
    %17 = vector.broadcast %16 : vector<1x128xf32> to vector<128x128xf32>
    %18 = arith.addf %15, %17 : vector<128x128xf32>
    %cst_15 = arith.constant 0.000000e+00 : f32
    %19 = vector.broadcast %cst_15 : f32 to vector<128x128xf32>
    %20 = arith.maximumf %18, %19 : vector<128x128xf32>
    %21 = vector.shape_cast %20 : vector<128x128xf32> to vector<8x16x128xf32>
    %cst_16 = arith.constant dense<0xFF800000> : vector<8x128xf32>
    %22 = vector.multi_reduction <maximumf>, %21, %cst_16 [1] : vector<8x16x128xf32> to vector<8x128xf32>
    %c0_17 = arith.constant 0 : index
    %c0_18 = arith.constant 0 : index
    %23 = vector.load %arg7[%c0_17, %c0_18] : memref<8x128xf32, #tpu.memory_space<vmem>>, vector<8x128xf32>
    tpu.vector_store %arg7[%c0_17, %c0_18], %22 {strides = array<i32>} : memref<8x128xf32, #tpu.memory_space<vmem>>, vector<8x128xf32>,
    return
  }
  func.func @transform_0(%arg0: i32) -> (i32, i32) {
    %c0_i32 = arith.constant 0 : i32
    %c0_i32_0 = arith.constant 0 : i32
    %c0_i32_1 = arith.constant 0 : i32
    return %c0_i32, %c0_i32_0 : i32, i32
  }
  func.func @transform_1(%arg0: i32) -> (i32, i32) {
    %c0_i32 = arith.constant 0 : i32
    %c0_i32_0 = arith.constant 0 : i32
    %c0_i32_1 = arith.constant 0 : i32
    return %c0_i32, %c0_i32_0 : i32, i32
  }
  func.func @transform_2(%arg0: i32) -> (i32, i32) {
    %c0_i32 = arith.constant 0 : i32
    %c0_i32_0 = arith.constant 0 : i32
    %c0_i32_1 = arith.constant 0 : i32
    return %c0_i32, %c0_i32_0 : i32, i32
  }
  func.func @transform_3(%arg0: i32) -> (i32, i32) {
    %c0_i32 = arith.constant 0 : i32
    %c0_i32_0 = arith.constant 0 : i32
    %c0_i32_1 = arith.constant 0 : i32
    return %c0_i32, %c0_i32_0 : i32, i32
  }
  func.func @transform_4(%arg0: i32) -> (i32, i32) {
    %c0_i32 = arith.constant 0 : i32
    %c0_i32_0 = arith.constant 0 : i32
    %c0_i32_1 = arith.constant 0 : i32
    return %c0_i32, %c0_i32_0 : i32, i32
  }
  func.func @transform_5(%arg0: i32) -> (i32, i32) {
    %c0_i32 = arith.constant 0 : i32
    %c0_i32_0 = arith.constant 0 : i32
    %c0_i32_1 = arith.constant 0 : i32
    return %c0_i32, %c0_i32_0 : i32, i32
  }
  func.func @transform_6(%arg0: i32) -> (i32, i32) {
    %c0_i32 = arith.constant 0 : i32
    %c0_i32_0 = arith.constant 0 : i32
    %c0_i32_1 = arith.constant 0 : i32
    return %c0_i32, %c0_i32_0 : i32, i32
  }
}

</mosaic_0001>

<llo_original>
// kernel: tpu_custom_call.1
$region0: #{tpu_custom_call.1}
  #allocation0 [shape = 'u32[]', space=smem, size = 0x4, offset = 0x4, fixed_abs, tag = 'smem constant byte address 0x4 - core index']
  #allocation1 [shape = 'u32[144,128]{1,0:T(1,128)}', space=vmem, size = 0x12000, scoped, tag = 'internal scratch']
  %s0 = inlined_call_operand.vmem [shape: bf16[128,128], index: 0, kind: input, shape index: {}]
  %s1 = inlined_call_operand.vmem [shape: bf16[128,8], index: 1, kind: input, shape index: {}]
  %s2 = inlined_call_operand.vmem [shape: bf16[8,128], index: 2, kind: input, shape index: {}]
  %s3 = inlined_call_operand.vmem [shape: f32[1,128], index: 3, kind: input, shape index: {}]
  %s4 = inlined_call_operand.hbm [shape: bf16[128,128], index: 4, kind: input, shape index: {}]
  %s5 = inlined_call_operand.vmem [shape: f32[1,128], index: 5, kind: input, shape index: {}]
  %s6 = inlined_call_operand.hbm [shape: f32[8,128], index: 6, kind: output, shape index: {}]
  %s7 = sld [smem:[#allocation0]]
  $region38: #{tpu_custom_call.1} parent=0
    _
  %s9 = ssub.s32 1, %s7
  %s10 = scalar_select 0, %s9, %s7
  $region1: #{tpu_custom_call.1} parent=0
    #allocation2 [shape = 'u8[32768]{0}', space=vmem, size = 0x8000, scoped, tag = 'input window, operand 4, single buffered']
    #allocation3 [shape = 's32[1]{0}', space=sflag, size = 0x4, scoped, tag = 'scoped memory for tpu_custom_call.1']
    #allocation4 [shape = 's32[1]{0}', space=sflag, size = 0x4, scoped, tag = 'scoped memory for tpu_custom_call.1']
    #allocation5 [shape = 'u8[4096]{0}', space=vmem, size = 0x1000, scoped, tag = 'output window, operand 0, single buffered']
    %11 = vsyncpa [#allocation3], 0
    %12 = vsyncpa [#allocation4], 0
    // Predicated region
    $region2: #{tpu_custom_call.1} parent=1 // pred_check
      _
    $region3: #{tpu_custom_call.1} parent=1 // pred_check_branch
      %14 = sbr.rel (0) target = $region5
    $region4: #{tpu_custom_call.1} parent=1 // pred_region
      _
    $region5: #{tpu_custom_call.1} parent=1 // pred_fallthru
      _
    // Predicated region
    $region6: #{tpu_custom_call.1} parent=1 // pred_check
      _
    $region7: #{tpu_custom_call.1} parent=1 // pred_check_branch
      %16 = sbr.rel (0) target = $region9
    $region8: #{tpu_custom_call.1} parent=1 // pred_region
      _
    $region9: #{tpu_custom_call.1} parent=1 // pred_fallthru
      _
    // Predicated region
    $region10: #{tpu_custom_call.1} parent=1 // pred_check
      _
    $region11: #{tpu_custom_call.1} parent=1 // pred_check_branch
      %18 = sbr.rel (0) target = $region13
    $region12: #{tpu_custom_call.1} parent=1 // pred_region
      _
    $region13: #{tpu_custom_call.1} parent=1 // pred_fallthru
      _
    // Predicated region
    $region14: #{tpu_custom_call.1} parent=1 // pred_check
      _
    $region15: #{tpu_custom_call.1} parent=1 // pred_check_branch
      %20 = sbr.rel (0) target = $region17
    $region16: #{tpu_custom_call.1} parent=1 // pred_region
      _
    $region17: #{tpu_custom_call.1} parent=1 // pred_fallthru
      _
    // Predicated region
    $region18: #{tpu_custom_call.1} parent=1 // pred_check
      _
    $region19: #{tpu_custom_call.1} parent=1 // pred_check_branch
      %22 = sbr.rel (0) target = $region21
    $region20: #{tpu_custom_call.1} parent=1 // pred_region
      %s24 = ssub.s32 1024, 1024
      %25 = vsyncadd [#allocation3], %s24
      %s26 = sshll.u32 [#allocation2], 4
      %s27 = int_to_ptr.vmem [resolvable:$true] %s26
      %32 = dma.hbm_to_vmem [thread:$0]  %s4, 1024, %s27, [#allocation3], 64, 64, 4
    $region21: #{tpu_custom_call.1} parent=1 // pred_fallthru
      _
    // Predicated region
    $region22: #{tpu_custom_call.1} parent=1 // pred_check
      _
    $region23: #{tpu_custom_call.1} parent=1 // pred_check_branch
      %34 = sbr.rel (0) target = $region25
    $region24: #{tpu_custom_call.1} parent=1 // pred_region
      _
    $region25: #{tpu_custom_call.1} parent=1 // pred_fallthru
      _
    // Predicated region
    $region26: #{tpu_custom_call.1} parent=1 // pred_check
      _
    $region27: #{tpu_custom_call.1} parent=1 // pred_check_branch
      %36 = sbr.rel (0) target = $region29
    $region28: #{tpu_custom_call.1} parent=1 // pred_region
      %37 = dma.done [#allocation3], 1024
    $region29: #{tpu_custom_call.1} parent=1 // pred_fallthru
      _
    %v39 = vld [vmem:[%s0] sm:$0xf]
    %v40 = vld [vmem:[%s0 + $0x4] sm:$0xf]
    %v41 = vld [vmem:[%s0 + $0x8] sm:$0xf]
    %v42 = vld [vmem:[%s0 + $0xc] sm:$0xf]
    %v43 = vld [vmem:[%s0 + $0x10] sm:$0xf]
    %v44 = vld [vmem:[%s0 + $0x14] sm:$0xf]
    %v45 = vld [vmem:[%s0 + $0x18] sm:$0xf]
    %v46 = vld [vmem:[%s0 + $0x1c] sm:$0xf]
    %v47 = vld [vmem:[%s0 + $0x20] sm:$0xf]
    %v48 = vld [vmem:[%s0 + $0x24] sm:$0xf]
    %v49 = vld [vmem:[%s0 + $0x28] sm:$0xf]
    %v50 = vld [vmem:[%s0 + $0x2c] sm:$0xf]
    %v51 = vld [vmem:[%s0 + $0x30] sm:$0xf]
    %v52 = vld [vmem:[%s0 + $0x34] sm:$0xf]
    %v53 = vld [vmem:[%s0 + $0x38] sm:$0xf]
    %v54 = vld [vmem:[%s0 + $0x3c] sm:$0xf]
    %v55 = vld [vmem:[%s1] sm:$0xf]
    %v56 = vld [vmem:[%s1 + $0x4] sm:$0xf]
    %v57 = vld [vmem:[%s1 + $0x8] sm:$0xf]
    %v58 = vld [vmem:[%s1 + $0xc] sm:$0xf]
    %v59 = vld [vmem:[%s1 + $0x10] sm:$0xf]
    %v60 = vld [vmem:[%s1 + $0x14] sm:$0xf]
    %v61 = vld [vmem:[%s1 + $0x18] sm:$0xf]
    %v62 = vld [vmem:[%s1 + $0x1c] sm:$0xf]
    %v63 = vld [vmem:[%s1 + $0x20] sm:$0xf]
    %v64 = vld [vmem:[%s1 + $0x24] sm:$0xf]
    %v65 = vld [vmem:[%s1 + $0x28] sm:$0xf]
    %v66 = vld [vmem:[%s1 + $0x2c] sm:$0xf]
    %v67 = vld [vmem:[%s1 + $0x30] sm:$0xf]
    %v68 = vld [vmem:[%s1 + $0x34] sm:$0xf]
    %v69 = vld [vmem:[%s1 + $0x38] sm:$0xf]
    %v70 = vld [vmem:[%s1 + $0x3c] sm:$0xf]
    %v87 = vunpack.c.l.b16 %v39
    %v88 = vunpack.c.l.b16 %v40
    %v89 = vunpack.c.l.b16 %v41
    %v90 = vunpack.c.l.b16 %v42
    %v91 = vunpack.c.l.b16 %v43
    %v92 = vunpack.c.l.b16 %v44
    %v93 = vunpack.c.l.b16 %v45
    %v94 = vunpack.c.l.b16 %v46
    %v95 = vunpack.c.l.b16 %v47
    %v96 = vunpack.c.l.b16 %v48
    %v97 = vunpack.c.l.b16 %v49
    %v98 = vunpack.c.l.b16 %v50
    %v99 = vunpack.c.l.b16 %v51
    %v100 = vunpack.c.l.b16 %v52
    %v101 = vunpack.c.l.b16 %v53
    %v102 = vunpack.c.l.b16 %v54
    %v103 = vpack.c.b16 %v88, %v87
    %v104 = vpack.c.b16 %v90, %v89
    %v105 = vpack.c.b16 %v92, %v91
    %v106 = vpack.c.b16 %v94, %v93
    %v107 = vpack.c.b16 %v96, %v95
    %v108 = vpack.c.b16 %v98, %v97
    %v109 = vpack.c.b16 %v100, %v99
    %v110 = vpack.c.b16 %v102, %v101
    %v135 = vunpack.c.l.b16 %v55
    %v136 = vunpack.c.l.b16 %v56
    %v137 = vunpack.c.l.b16 %v57
    %v138 = vunpack.c.l.b16 %v58
    %v139 = vunpack.c.l.b16 %v59
    %v140 = vunpack.c.l.b16 %v60
    %v141 = vunpack.c.l.b16 %v61
    %v142 = vunpack.c.l.b16 %v62
    %v143 = vunpack.c.l.b16 %v63
    %v144 = vunpack.c.l.b16 %v64
    %v145 = vunpack.c.l.b16 %v65
    %v146 = vunpack.c.l.b16 %v66
    %v147 = vunpack.c.l.b16 %v67
    %v148 = vunpack.c.l.b16 %v68
    %v149 = vunpack.c.l.b16 %v69
    %v150 = vunpack.c.l.b16 %v70
    %v151 = vpack.c.b16 %v136, %v135
    %v152 = vpack.c.b16 %v138, %v137
    %v153 = vpack.c.b16 %v140, %v139
    %v154 = vpack.c.b16 %v142, %v141
    %v155 = vpack.c.b16 %v144, %v143
    %v156 = vpack.c.b16 %v146, %v145
    %v157 = vpack.c.b16 %v148, %v147
    %v158 = vpack.c.b16 %v150, %v149
    %167 = vmatprep.subr.bf16.mxu0 0
    %168 = vmatpush1.bf16.msra.mxu0 %v151
    %169 = vmatprep.subr.bf16.mxu0 0
    %170 = vmatpush1.bf16.msra.mxu0 %v152
    %171 = vmatprep.subr.bf16.mxu0 0
    %172 = vmatpush1.bf16.msra.mxu0 %v153
    %173 = vmatprep.subr.bf16.mxu0 0
    %174 = vmatpush1.bf16.msra.mxu0 %v154
    %175 = vmatprep.subr.bf16.mxu0 0
    %176 = vmatpush1.bf16.msra.mxu0 %v155
    %177 = vmatprep.subr.bf16.mxu0 0
    %178 = vmatpush1.bf16.msra.mxu0 %v156
    %179 = vmatprep.subr.bf16.mxu0 0
    %180 = vmatpush1.bf16.msra.mxu0 %v157
    %181 = vmatprep.subr.bf16.mxu0 0
    %182 = vmatpush1.bf16.msra.mxu0 %v158
    %183 = vmatprep.subr.bf16.mxu0 0
    %184 = vmatpush1.bf16.msra.mxu0 0
    %185 = vmatprep.subr.bf16.mxu0 0
    %186 = vmatpush1.bf16.msra.mxu0 0
    %187 = vmatprep.subr.bf16.mxu0 0
    %188 = vmatpush1.bf16.msra.mxu0 0
    %189 = vmatprep.subr.bf16.mxu0 0
    %190 = vmatpush1.bf16.msra.mxu0 0
    %191 = vmatprep.subr.bf16.mxu0 0
    %192 = vmatpush1.bf16.msra.mxu0 0
    %193 = vmatprep.subr.bf16.mxu0 0
    %194 = vmatpush1.bf16.msra.mxu0 0
    %195 = vmatprep.subr.bf16.mxu0 0
    %196 = vmatpush1.bf16.msra.mxu0 0
    %197 = vmatprep.subr.bf16.mxu0 0
    %198 = vmatpush1.bf16.msra.mxu0 0
    %199 = vmatprep.mubr.bf16.mxu0 0
    %200 = vmatmul.mubr.bf16.gmra.mrb[0].mxu0 %v103
    %v201 = vpop.f32.mrb[0].mxu0
    %v202 = vadd.f32 0.0, %v201
    %v203 = vpop.f32.mrb[0].mxu0
    %v204 = vpop.f32.mrb[0].mxu0
    %v205 = vadd.f32 0.0, %v204
    %v206 = vpop.f32.mrb[0].mxu0
    %207 = vmatprep.mubr.bf16.mxu0 0
    %208 = vmatmul.mubr.bf16.gmra.mrb[0].mxu0 %v104
    %v209 = vpop.f32.mrb[0].mxu0
    %v210 = vadd.f32 0.0, %v209
    %v211 = vpop.f32.mrb[0].mxu0
    %v212 = vpop.f32.mrb[0].mxu0
    %v213 = vadd.f32 0.0, %v212
    %v214 = vpop.f32.mrb[0].mxu0
    %215 = vmatprep.mubr.bf16.mxu0 0
    %216 = vmatmul.mubr.bf16.gmra.mrb[0].mxu0 %v105
    %v217 = vpop.f32.mrb[0].mxu0
    %v218 = vadd.f32 0.0, %v217
    %v219 = vpop.f32.mrb[0].mxu0
    %v220 = vpop.f32.mrb[0].mxu0
    %v221 = vadd.f32 0.0, %v220
    %v222 = vpop.f32.mrb[0].mxu0
    %223 = vmatprep.mubr.bf16.mxu0 0
    %224 = vmatmul.mubr.bf16.gmra.mrb[0].mxu0 %v106
    %v225 = vpop.f32.mrb[0].mxu0
    %v226 = vadd.f32 0.0, %v225
    %v227 = vpop.f32.mrb[0].mxu0
    %v228 = vpop.f32.mrb[0].mxu0
    %v229 = vadd.f32 0.0, %v228
    %v230 = vpop.f32.mrb[0].mxu0
    %231 = vmatprep.mubr.bf16.mxu0 0
    %232 = vmatmul.mubr.bf16.gmra.mrb[0].mxu0 %v107
    %v233 = vpop.f32.mrb[0].mxu0
    %v234 = vadd.f32 0.0, %v233
    %v235 = vpop.f32.mrb[0].mxu0
    %v236 = vpop.f32.mrb[0].mxu0
    %v237 = vadd.f32 0.0, %v236
    %v238 = vpop.f32.mrb[0].mxu0
    %239 = vmatprep.mubr.bf16.mxu0 0
    %240 = vmatmul.mubr.bf16.gmra.mrb[0].mxu0 %v108
    %v241 = vpop.f32.mrb[0].mxu0
    %v242 = vadd.f32 0.0, %v241
    %v243 = vpop.f32.mrb[0].mxu0
    %v244 = vpop.f32.mrb[0].mxu0
    %v245 = vadd.f32 0.0, %v244
    %v246 = vpop.f32.mrb[0].mxu0
    %247 = vmatprep.mubr.bf16.mxu0 0
    %248 = vmatmul.mubr.bf16.gmra.mrb[0].mxu0 %v109
    %v249 = vpop.f32.mrb[0].mxu0
    %v250 = vadd.f32 0.0, %v249
    %v251 = vpop.f32.mrb[0].mxu0
    %v252 = vpop.f32.mrb[0].mxu0
    %v253 = vadd.f32 0.0, %v252
    %v254 = vpop.f32.mrb[0].mxu0
    %255 = vmatprep.mubr.bf16.mxu0 0
    %256 = vmatmul.mubr.bf16.gmra.mrb[0].mxu0 %v110
    %v257 = vpop.f32.mrb[0].mxu0
    %v258 = vadd.f32 0.0, %v257
    %v259 = vpop.f32.mrb[0].mxu0
    %v260 = vpop.f32.mrb[0].mxu0
    %v261 = vadd.f32 0.0, %v260
    %v262 = vpop.f32.mrb[0].mxu0
    %263 = vdwg.mxu0
    %v264 = vpack.c.bf16 %v205, %v202
    %v265 = vpack.c.bf16 %v213, %v210
    %v266 = vpack.c.bf16 %v221, %v218
    %v267 = vpack.c.bf16 %v229, %v226
    %v268 = vpack.c.bf16 %v237, %v234
    %v269 = vpack.c.bf16 %v245, %v242
    %v270 = vpack.c.bf16 %v253, %v250
    %v271 = vpack.c.bf16 %v261, %v258
    %v272 = vld [vmem:[%s2] sm:$0xf]
    %v273 = vld [vmem:[%s3] sm:$0x1]
    %v275 = vlaneseq
    %v276 = vshrl.u32 %v275, 7
    %v277 = vsub.s32 0, %v276
    %v278 = vrot.slane %v273, %v277
    %vm280 = vcmask 64512
    %v282 = vsel %vm280, %v264, 0
    %v285 = vsel %vm280, %v265, 0
    %v288 = vsel %vm280, %v266, 0
    %v291 = vsel %vm280, %v267, 0
    %v294 = vsel %vm280, %v268, 0
    %v297 = vsel %vm280, %v269, 0
    %v300 = vsel %vm280, %v270, 0
    %v303 = vsel %vm280, %v271, 0
    %vm305 = vcmask 1043456
    %v307 = vsel %vm305, %v272, 0
    %309 = vmatprep.subr.bf16.mxu0 0
    %310 = vmatpush1.bf16.msra.mxu0 %v307
    %311 = vmatprep.subr.bf16.mxu0 0
    %312 = vmatpush1.bf16.msra.mxu0 0
    %313 = vmatprep.subr.bf16.mxu0 0
    %314 = vmatpush1.bf16.msra.mxu0 0
    %315 = vmatprep.subr.bf16.mxu0 0
    %316 = vmatpush1.bf16.msra.mxu0 0
    %317 = vmatprep.subr.bf16.mxu0 0
    %318 = vmatpush1.bf16.msra.mxu0 0
    %319 = vmatprep.subr.bf16.mxu0 0
    %320 = vmatpush1.bf16.msra.mxu0 0
    %321 = vmatprep.subr.bf16.mxu0 0
    %322 = vmatpush1.bf16.msra.mxu0 0
    %323 = vmatprep.subr.bf16.mxu0 0
    %324 = vmatpush1.bf16.msra.mxu0 0
    %325 = vmatprep.subr.bf16.mxu0 0
    %326 = vmatpush1.bf16.msra.mxu0 0
    %327 = vmatprep.subr.bf16.mxu0 0
    %328 = vmatpush1.bf16.msra.mxu0 0
    %329 = vmatprep.subr.bf16.mxu0 0
    %330 = vmatpush1.bf16.msra.mxu0 0
    %331 = vmatprep.subr.bf16.mxu0 0
    %332 = vmatpush1.bf16.msra.mxu0 0
    %333 = vmatprep.subr.bf16.mxu0 0
    %334 = vmatpush1.bf16.msra.mxu0 0
    %335 = vmatprep.subr.bf16.mxu0 0
    %336 = vmatpush1.bf16.msra.mxu0 0
    %337 = vmatprep.subr.bf16.mxu0 0
    %338 = vmatpush1.bf16.msra.mxu0 0
    %339 = vmatprep.subr.bf16.mxu0 0
    %340 = vmatpush1.bf16.msra.mxu0 0
    %341 = vmatprep.mubr.bf16.mxu0 0
    %342 = vmatmul.mubr.bf16.gmra.mrb[0].mxu0 %v282
    %v343 = vpop.f32.mrb[0].mxu0
    %v344 = vadd.f32 %v278, %v343
    %v345 = vpop.f32.mrb[0].mxu0
    %v346 = vpop.f32.mrb[0].mxu0
    %v347 = vadd.f32 %v278, %v346
    %v348 = vpop.f32.mrb[0].mxu0
    %349 = vmatprep.mubr.bf16.mxu0 0
    %350 = vmatmul.mubr.bf16.gmra.mrb[0].mxu0 %v285
    %v351 = vpop.f32.mrb[0].mxu0
    %v352 = vadd.f32 %v278, %v351
    %v353 = vpop.f32.mrb[0].mxu0
    %v354 = vpop.f32.mrb[0].mxu0
    %v355 = vadd.f32 %v278, %v354
    %v356 = vpop.f32.mrb[0].mxu0
    %357 = vmatprep.mubr.bf16.mxu0 0
    %358 = vmatmul.mubr.bf16.gmra.mrb[0].mxu0 %v288
    %v359 = vpop.f32.mrb[0].mxu0
    %v360 = vadd.f32 %v278, %v359
    %v361 = vpop.f32.mrb[0].mxu0
    %v362 = vpop.f32.mrb[0].mxu0
    %v363 = vadd.f32 %v278, %v362
    %v364 = vpop.f32.mrb[0].mxu0
    %365 = vmatprep.mubr.bf16.mxu0 0
    %366 = vmatmul.mubr.bf16.gmra.mrb[0].mxu0 %v291
    %v367 = vpop.f32.mrb[0].mxu0
    %v368 = vadd.f32 %v278, %v367
    %v369 = vpop.f32.mrb[0].mxu0
    %v370 = vpop.f32.mrb[0].mxu0
    %v371 = vadd.f32 %v278, %v370
    %v372 = vpop.f32.mrb[0].mxu0
    %373 = vmatprep.mubr.bf16.mxu0 0
    %374 = vmatmul.mubr.bf16.gmra.mrb[0].mxu0 %v294
    %v375 = vpop.f32.mrb[0].mxu0
    %v376 = vadd.f32 %v278, %v375
    %v377 = vpop.f32.mrb[0].mxu0
    %v378 = vpop.f32.mrb[0].mxu0
    %v379 = vadd.f32 %v278, %v378
    %v380 = vpop.f32.mrb[0].mxu0
    %381 = vmatprep.mubr.bf16.mxu0 0
    %382 = vmatmul.mubr.bf16.gmra.mrb[0].mxu0 %v297
    %v383 = vpop.f32.mrb[0].mxu0
    %v384 = vadd.f32 %v278, %v383
    %v385 = vpop.f32.mrb[0].mxu0
    %v386 = vpop.f32.mrb[0].mxu0
    %v387 = vadd.f32 %v278, %v386
    %v388 = vpop.f32.mrb[0].mxu0
    %389 = vmatprep.mubr.bf16.mxu0 0
    %390 = vmatmul.mubr.bf16.gmra.mrb[0].mxu0 %v300
    %v391 = vpop.f32.mrb[0].mxu0
    %v392 = vadd.f32 %v278, %v391
    %v393 = vpop.f32.mrb[0].mxu0
    %v394 = vpop.f32.mrb[0].mxu0
    %v395 = vadd.f32 %v278, %v394
    %v396 = vpop.f32.mrb[0].mxu0
    %397 = vmatprep.mubr.bf16.mxu0 0
    %398 = vmatmul.mubr.bf16.gmra.mrb[0].mxu0 %v303
    %v399 = vpop.f32.mrb[0].mxu0
    %v400 = vadd.f32 %v278, %v399
    %v401 = vpop.f32.mrb[0].mxu0
    %v402 = vpop.f32.mrb[0].mxu0
    %v403 = vadd.f32 %v278, %v402
    %v404 = vpop.f32.mrb[0].mxu0
    %405 = vdwg.mxu0
    %v406 = vmax.f32 %v344, 0.0
    %v407 = vmax.f32 %v347, 0.0
    %v408 = vmax.f32 %v352, 0.0
    %v409 = vmax.f32 %v355, 0.0
    %v410 = vmax.f32 %v360, 0.0
    %v411 = vmax.f32 %v363, 0.0
    %v412 = vmax.f32 %v368, 0.0
    %v413 = vmax.f32 %v371, 0.0
    %v414 = vmax.f32 %v376, 0.0
    %v415 = vmax.f32 %v379, 0.0
    %v416 = vmax.f32 %v384, 0.0
    %v417 = vmax.f32 %v387, 0.0
    %v418 = vmax.f32 %v392, 0.0
    %v419 = vmax.f32 %v395, 0.0
    %v420 = vmax.f32 %v400, 0.0
    %v421 = vmax.f32 %v403, 0.0
    %v422 = vpack.c.bf16 %v407, %v406
    %v423 = vpack.c.bf16 %v409, %v408
    %v424 = vpack.c.bf16 %v411, %v410
    %v425 = vpack.c.bf16 %v413, %v412
    %v426 = vpack.c.bf16 %v415, %v414
    %v427 = vpack.c.bf16 %v417, %v416
    %v428 = vpack.c.bf16 %v419, %v418
    %v429 = vpack.c.bf16 %v421, %v420
    %430 = vmatprep.subr.bf16.mxu0 0
    %431 = vmatpush1.bf16.msra.mxu0 %v422
    %432 = vmatprep.subr.bf16.mxu0 0
    %433 = vmatpush1.bf16.msra.mxu0 %v423
    %434 = vmatprep.subr.bf16.mxu0 0
    %435 = vmatpush1.bf16.msra.mxu0 %v424
    %436 = vmatprep.subr.bf16.mxu0 0
    %437 = vmatpush1.bf16.msra.mxu0 %v425
    %438 = vmatprep.subr.bf16.mxu0 0
    %439 = vmatpush1.bf16.msra.mxu0 %v426
    %440 = vmatprep.subr.bf16.mxu0 0
    %441 = vmatpush1.bf16.msra.mxu0 %v427
    %442 = vmatprep.subr.bf16.mxu0 0
    %443 = vmatpush1.bf16.msra.mxu0 %v428
    %444 = vmatprep.subr.bf16.mxu0 0
    %445 = vmatpush1.bf16.msra.mxu0 %v429
    %446 = vmatprep.subr.bf16.mxu0 0
    %447 = vmatpush1.bf16.msra.mxu0 0
    %448 = vmatprep.subr.bf16.mxu0 0
    %449 = vmatpush1.bf16.msra.mxu0 0
    %450 = vmatprep.subr.bf16.mxu0 0
    %451 = vmatpush1.bf16.msra.mxu0 0
    %452 = vmatprep.subr.bf16.mxu0 0
    %453 = vmatpush1.bf16.msra.mxu0 0
    %454 = vmatprep.subr.bf16.mxu0 0
    %455 = vmatpush1.bf16.msra.mxu0 0
    %456 = vmatprep.subr.bf16.mxu0 0
    %457 = vmatpush1.bf16.msra.mxu0 0
    %458 = vmatprep.subr.bf16.mxu0 0
    %459 = vmatpush1.bf16.msra.mxu0 0
    %460 = vmatprep.subr.bf16.mxu0 0
    %461 = vmatpush1.bf16.msra.mxu0 0
    %462 = vmatprep.mubr.bf16.mxu0 0
    %463 = vmatmul.mubr.bf16.gmra.mrb[0].mxu0 %v103
    %v464 = vpop.f32.mrb[0].mxu0
    %v465 = vadd.f32 0.0, %v464
    %v466 = vpop.f32.mrb[0].mxu0
    %v467 = vpop.f32.mrb[0].mxu0
    %v468 = vadd.f32 0.0, %v467
    %v469 = vpop.f32.mrb[0].mxu0
    %470 = vmatprep.mubr.bf16.mxu0 0
    %471 = vmatmul.mubr.bf16.gmra.mrb[0].mxu0 %v104
    %v472 = vpop.f32.mrb[0].mxu0
    %v473 = vadd.f32 0.0, %v472
    %v474 = vpop.f32.mrb[0].mxu0
    %v475 = vpop.f32.mrb[0].mxu0
    %v476 = vadd.f32 0.0, %v475
    %v477 = vpop.f32.mrb[0].mxu0
    %478 = vmatprep.mubr.bf16.mxu0 0
    %479 = vmatmul.mubr.bf16.gmra.mrb[0].mxu0 %v105
    %v480 = vpop.f32.mrb[0].mxu0
    %v481 = vadd.f32 0.0, %v480
    %v482 = vpop.f32.mrb[0].mxu0
    %v483 = vpop.f32.mrb[0].mxu0
    %v484 = vadd.f32 0.0, %v483
    %v485 = vpop.f32.mrb[0].mxu0
    %486 = vmatprep.mubr.bf16.mxu0 0
    %487 = vmatmul.mubr.bf16.gmra.mrb[0].mxu0 %v106
    %v488 = vpop.f32.mrb[0].mxu0
    %v489 = vadd.f32 0.0, %v488
    %v490 = vpop.f32.mrb[0].mxu0
    %v491 = vpop.f32.mrb[0].mxu0
    %v492 = vadd.f32 0.0, %v491
    %v493 = vpop.f32.mrb[0].mxu0
    %494 = vmatprep.mubr.bf16.mxu0 0
    %495 = vmatmul.mubr.bf16.gmra.mrb[0].mxu0 %v107
    %v496 = vpop.f32.mrb[0].mxu0
    %v497 = vadd.f32 0.0, %v496
    %v498 = vpop.f32.mrb[0].mxu0
    %v499 = vpop.f32.mrb[0].mxu0
    %v500 = vadd.f32 0.0, %v499
    %v501 = vpop.f32.mrb[0].mxu0
    %502 = vmatprep.mubr.bf16.mxu0 0
    %503 = vmatmul.mubr.bf16.gmra.mrb[0].mxu0 %v108
    %v504 = vpop.f32.mrb[0].mxu0
    %v505 = vadd.f32 0.0, %v504
    %v506 = vpop.f32.mrb[0].mxu0
    %v507 = vpop.f32.mrb[0].mxu0
    %v508 = vadd.f32 0.0, %v507
    %v509 = vpop.f32.mrb[0].mxu0
    %510 = vmatprep.mubr.bf16.mxu0 0
    %511 = vmatmul.mubr.bf16.gmra.mrb[0].mxu0 %v109
    %v512 = vpop.f32.mrb[0].mxu0
    %v513 = vadd.f32 0.0, %v512
    %v514 = vpop.f32.mrb[0].mxu0
    %v515 = vpop.f32.mrb[0].mxu0
    %v516 = vadd.f32 0.0, %v515
    %v517 = vpop.f32.mrb[0].mxu0
    %518 = vmatprep.mubr.bf16.mxu0 0
    %519 = vmatmul.mubr.bf16.gmra.mrb[0].mxu0 %v110
    %v520 = vpop.f32.mrb[0].mxu0
    %v521 = vadd.f32 0.0, %v520
    %v522 = vpop.f32.mrb[0].mxu0
    %v523 = vpop.f32.mrb[0].mxu0
    %v524 = vadd.f32 0.0, %v523
    %v525 = vpop.f32.mrb[0].mxu0
    %526 = vdwg.mxu0
    %v527 = vpack.c.bf16 %v468, %v465
    %v528 = vpack.c.bf16 %v476, %v473
    %v529 = vpack.c.bf16 %v484, %v481
    %v530 = vpack.c.bf16 %v492, %v489
    %v531 = vpack.c.bf16 %v500, %v497
    %v532 = vpack.c.bf16 %v508, %v505
    %v533 = vpack.c.bf16 %v516, %v513
    %v534 = vpack.c.bf16 %v524, %v521
    %v535 = vld [vmem:[#allocation2] sm:$0xf]
    %v536 = vld [vmem:[#allocation2 + $0x4] sm:$0xf]
    %v537 = vld [vmem:[#allocation2 + $0x8] sm:$0xf]
    %v538 = vld [vmem:[#allocation2 + $0xc] sm:$0xf]
    %v539 = vld [vmem:[#allocation2 + $0x10] sm:$0xf]
    %v540 = vld [vmem:[#allocation2 + $0x14] sm:$0xf]
    %v541 = vld [vmem:[#allocation2 + $0x18] sm:$0xf]
    %v542 = vld [vmem:[#allocation2 + $0x1c] sm:$0xf]
    %v543 = vld [vmem:[#allocation2 + $0x20] sm:$0xf]
    %v544 = vld [vmem:[#allocation2 + $0x24] sm:$0xf]
    %v545 = vld [vmem:[#allocation2 + $0x28] sm:$0xf]
    %v546 = vld [vmem:[#allocation2 + $0x2c] sm:$0xf]
    %v547 = vld [vmem:[#allocation2 + $0x30] sm:$0xf]
    %v548 = vld [vmem:[#allocation2 + $0x34] sm:$0xf]
    %v549 = vld [vmem:[#allocation2 + $0x38] sm:$0xf]
    %v550 = vld [vmem:[#allocation2 + $0x3c] sm:$0xf]
    %v551 = vld [vmem:[%s5] sm:$0x1]
    %v553 = vlaneseq
    %v554 = vshrl.u32 %v553, 7
    %v555 = vsub.s32 0, %v554
    %v556 = vrot.slane %v551, %v555
    %v574 = vunpack.c.l.b16 %v535
    %v575 = vunpack.c.l.b16 %v536
    %v576 = vunpack.c.l.b16 %v537
    %v577 = vunpack.c.l.b16 %v538
    %v578 = vunpack.c.l.b16 %v539
    %v579 = vunpack.c.l.b16 %v540
    %v580 = vunpack.c.l.b16 %v541
    %v581 = vunpack.c.l.b16 %v542
    %v582 = vunpack.c.l.b16 %v543
    %v583 = vunpack.c.l.b16 %v544
    %v584 = vunpack.c.l.b16 %v545
    %v585 = vunpack.c.l.b16 %v546
    %v586 = vunpack.c.l.b16 %v547
    %v587 = vunpack.c.l.b16 %v548
    %v588 = vunpack.c.l.b16 %v549
    %v589 = vunpack.c.l.b16 %v550
    %v590 = vpack.c.b16 %v575, %v574
    %v591 = vpack.c.b16 %v577, %v576
    %v592 = vpack.c.b16 %v579, %v578
    %v593 = vpack.c.b16 %v581, %v580
    %v594 = vpack.c.b16 %v583, %v582
    %v595 = vpack.c.b16 %v585, %v584
    %v596 = vpack.c.b16 %v587, %v586
    %v597 = vpack.c.b16 %v589, %v588
    %606 = vmatprep.subr.bf16.mxu0 0
    %607 = vmatpush1.bf16.msra.mxu0 %v590
    %608 = vmatprep.subr.bf16.mxu0 0
    %609 = vmatpush1.bf16.msra.mxu0 %v591
    %610 = vmatprep.subr.bf16.mxu0 0
    %611 = vmatpush1.bf16.msra.mxu0 %v592
    %612 = vmatprep.subr.bf16.mxu0 0
    %613 = vmatpush1.bf16.msra.mxu0 %v593
    %614 = vmatprep.subr.bf16.mxu0 0
    %615 = vmatpush1.bf16.msra.mxu0 %v594
    %616 = vmatprep.subr.bf16.mxu0 0
    %617 = vmatpush1.bf16.msra.mxu0 %v595
    %618 = vmatprep.subr.bf16.mxu0 0
    %619 = vmatpush1.bf16.msra.mxu0 %v596
    %620 = vmatprep.subr.bf16.mxu0 0
    %621 = vmatpush1.bf16.msra.mxu0 %v597
    %622 = vmatprep.subr.bf16.mxu0 0
    %623 = vmatpush1.bf16.msra.mxu0 0
    %624 = vmatprep.subr.bf16.mxu0 0
    %625 = vmatpush1.bf16.msra.mxu0 0
    %626 = vmatprep.subr.bf16.mxu0 0
    %627 = vmatpush1.bf16.msra.mxu0 0
    %628 = vmatprep.subr.bf16.mxu0 0
    %629 = vmatpush1.bf16.msra.mxu0 0
    %630 = vmatprep.subr.bf16.mxu0 0
    %631 = vmatpush1.bf16.msra.mxu0 0
    %632 = vmatprep.subr.bf16.mxu0 0
    %633 = vmatpush1.bf16.msra.mxu0 0
    %634 = vmatprep.subr.bf16.mxu0 0
    %635 = vmatpush1.bf16.msra.mxu0 0
    %636 = vmatprep.subr.bf16.mxu0 0
    %637 = vmatpush1.bf16.msra.mxu0 0
    %638 = vmatprep.mubr.bf16.mxu0 0
    %639 = vmatmul.mubr.bf16.gmra.mrb[0].mxu0 %v527
    %v640 = vpop.f32.mrb[0].mxu0
    %v641 = vadd.f32 %v556, %v640
    %v642 = vpop.f32.mrb[0].mxu0
    %v643 = vpop.f32.mrb[0].mxu0
    %v644 = vadd.f32 %v556, %v643
    %v645 = vpop.f32.mrb[0].mxu0
    %646 = vmatprep.mubr.bf16.mxu0 0
    %647 = vmatmul.mubr.bf16.gmra.mrb[0].mxu0 %v528
    %v648 = vpop.f32.mrb[0].mxu0
    %v649 = vadd.f32 %v556, %v648
    %v650 = vpop.f32.mrb[0].mxu0
    %v651 = vpop.f32.mrb[0].mxu0
    %v652 = vadd.f32 %v556, %v651
    %v653 = vpop.f32.mrb[0].mxu0
    %654 = vmatprep.mubr.bf16.mxu0 0
    %655 = vmatmul.mubr.bf16.gmra.mrb[0].mxu0 %v529
    %v656 = vpop.f32.mrb[0].mxu0
    %v657 = vadd.f32 %v556, %v656
    %v658 = vpop.f32.mrb[0].mxu0
    %v659 = vpop.f32.mrb[0].mxu0
    %v660 = vadd.f32 %v556, %v659
    %v661 = vpop.f32.mrb[0].mxu0
    %662 = vmatprep.mubr.bf16.mxu0 0
    %663 = vmatmul.mubr.bf16.gmra.mrb[0].mxu0 %v530
    %v664 = vpop.f32.mrb[0].mxu0
    %v665 = vadd.f32 %v556, %v664
    %v666 = vpop.f32.mrb[0].mxu0
    %v667 = vpop.f32.mrb[0].mxu0
    %v668 = vadd.f32 %v556, %v667
    %v669 = vpop.f32.mrb[0].mxu0
    %670 = vmatprep.mubr.bf16.mxu0 0
    %671 = vmatmul.mubr.bf16.gmra.mrb[0].mxu0 %v531
    %v672 = vpop.f32.mrb[0].mxu0
    %v673 = vadd.f32 %v556, %v672
    %v674 = vpop.f32.mrb[0].mxu0
    %v675 = vpop.f32.mrb[0].mxu0
    %v676 = vadd.f32 %v556, %v675
    %v677 = vpop.f32.mrb[0].mxu0
    %678 = vmatprep.mubr.bf16.mxu0 0
    %679 = vmatmul.mubr.bf16.gmra.mrb[0].mxu0 %v532
    %v680 = vpop.f32.mrb[0].mxu0
    %v681 = vadd.f32 %v556, %v680
    %v682 = vpop.f32.mrb[0].mxu0
    %v683 = vpop.f32.mrb[0].mxu0
    %v684 = vadd.f32 %v556, %v683
    %v685 = vpop.f32.mrb[0].mxu0
    %686 = vmatprep.mubr.bf16.mxu0 0
    %687 = vmatmul.mubr.bf16.gmra.mrb[0].mxu0 %v533
    %v688 = vpop.f32.mrb[0].mxu0
    %v689 = vadd.f32 %v556, %v688
    %v690 = vpop.f32.mrb[0].mxu0
    %v691 = vpop.f32.mrb[0].mxu0
    %v692 = vadd.f32 %v556, %v691
    %v693 = vpop.f32.mrb[0].mxu0
    %694 = vmatprep.mubr.bf16.mxu0 0
    %695 = vmatmul.mubr.bf16.gmra.mrb[0].mxu0 %v534
    %v696 = vpop.f32.mrb[0].mxu0
    %v697 = vadd.f32 %v556, %v696
    %v698 = vpop.f32.mrb[0].mxu0
    %v699 = vpop.f32.mrb[0].mxu0
    %v700 = vadd.f32 %v556, %v699
    %v701 = vpop.f32.mrb[0].mxu0
    %702 = vdwg.mxu0
    %v703 = vmax.f32 %v641, 0.0
    %v704 = vmax.f32 %v644, 0.0
    %v705 = vmax.f32 %v649, 0.0
    %v706 = vmax.f32 %v652, 0.0
    %v707 = vmax.f32 %v657, 0.0
    %v708 = vmax.f32 %v660, 0.0
    %v709 = vmax.f32 %v665, 0.0
    %v710 = vmax.f32 %v668, 0.0
    %v711 = vmax.f32 %v673, 0.0
    %v712 = vmax.f32 %v676, 0.0
    %v713 = vmax.f32 %v681, 0.0
    %v714 = vmax.f32 %v684, 0.0
    %v715 = vmax.f32 %v689, 0.0
    %v716 = vmax.f32 %v692, 0.0
    %v717 = vmax.f32 %v697, 0.0
    %v718 = vmax.f32 %v700, 0.0
    %v719 = vmax.f32 %v703, %v704
    %v720 = vrot.slane %v719, 4
    %v721 = vmax.f32 %v719, %v720
    %v722 = vrot.slane %v721, 2
    %v723 = vmax.f32 %v721, %v722
    %v724 = vrot.slane %v723, 1
    %v725 = vmax.f32 %v723, %v724
    %v726 = vmax.f32 %v705, %v706
    %v727 = vrot.slane %v726, 4
    %v728 = vmax.f32 %v726, %v727
    %v729 = vrot.slane %v728, 2
    %v730 = vmax.f32 %v728, %v729
    %v731 = vrot.slane %v730, 1
    %v732 = vmax.f32 %v730, %v731
    %v733 = vmax.f32 %v707, %v708
    %v734 = vrot.slane %v733, 4
    %v735 = vmax.f32 %v733, %v734
    %v736 = vrot.slane %v735, 2
    %v737 = vmax.f32 %v735, %v736
    %v738 = vrot.slane %v737, 1
    %v739 = vmax.f32 %v737, %v738
    %v740 = vmax.f32 %v709, %v710
    %v741 = vrot.slane %v740, 4
    %v742 = vmax.f32 %v740, %v741
    %v743 = vrot.slane %v742, 2
    %v744 = vmax.f32 %v742, %v743
    %v745 = vrot.slane %v744, 1
    %v746 = vmax.f32 %v744, %v745
    %v747 = vmax.f32 %v711, %v712
    %v748 = vrot.slane %v747, 4
    %v749 = vmax.f32 %v747, %v748
    %v750 = vrot.slane %v749, 2
    %v751 = vmax.f32 %v749, %v750
    %v752 = vrot.slane %v751, 1
    %v753 = vmax.f32 %v751, %v752
    %v754 = vmax.f32 %v713, %v714
    %v755 = vrot.slane %v754, 4
    %v756 = vmax.f32 %v754, %v755
    %v757 = vrot.slane %v756, 2
    %v758 = vmax.f32 %v756, %v757
    %v759 = vrot.slane %v758, 1
    %v760 = vmax.f32 %v758, %v759
    %v761 = vmax.f32 %v715, %v716
    %v762 = vrot.slane %v761, 4
    %v763 = vmax.f32 %v761, %v762
    %v764 = vrot.slane %v763, 2
    %v765 = vmax.f32 %v763, %v764
    %v766 = vrot.slane %v765, 1
    %v767 = vmax.f32 %v765, %v766
    %v768 = vmax.f32 %v717, %v718
    %v769 = vrot.slane %v768, 4
    %v770 = vmax.f32 %v768, %v769
    %v771 = vrot.slane %v770, 2
    %v772 = vmax.f32 %v770, %v771
    %v773 = vrot.slane %v772, 1
    %v774 = vmax.f32 %v772, %v773
    %vm783 = vcmask 1041409
    %v784 = vsel %vm783, %v732, %v725
    %vm785 = vcmask 1042434
    %v786 = vsel %vm785, %v739, %v784
    %vm787 = vcmask 1043459
    %v788 = vsel %vm787, %v746, %v786
    %vm789 = vcmask 1044484
    %v790 = vsel %vm789, %v753, %v788
    %vm791 = vcmask 1045509
    %v792 = vsel %vm791, %v760, %v790
    %vm793 = vcmask 1046534
    %v794 = vsel %vm793, %v767, %v792
    %vm795 = vcmask 1047559
    %v796 = vsel %vm795, %v774, %v794
    %798 = vst [vmem:[#allocation5] sm:$0xff] %v796
    // Predicated region
    $region30: #{tpu_custom_call.1} parent=1 // pred_check
      _
    $region31: #{tpu_custom_call.1} parent=1 // pred_check_branch
      %800 = sbr.rel (0) target = $region33
    $region32: #{tpu_custom_call.1} parent=1 // pred_region
      %s802 = ssub.s32 128, 128
      %803 = vsyncadd [#allocation4], %s802
      %s805 = sshll.u32 [#allocation5], 4
      %s806 = int_to_ptr.vmem [resolvable:$true] %s805
      %808 = dma.vmem_to_hbm [thread:$0]  %s806, 128, %s6, [#allocation4]
    $region33: #{tpu_custom_call.1} parent=1 // pred_fallthru
      _
    // Predicated region
    $region34: #{tpu_custom_call.1} parent=1 // pred_check
      _
    $region35: #{tpu_custom_call.1} parent=1 // pred_check_branch
      %810 = sbr.rel (0) target = $region37
    $region36: #{tpu_custom_call.1} parent=1 // pred_region
      %811 = dma.done [#allocation4], 128
    $region37: #{tpu_custom_call.1} parent=1 // pred_fallthru
      _
    %812 = vsyncpa [#allocation3], 1
    %813 = vsyncpa [#allocation4], 1

</llo_original>
